<compile_context>
chip_gen: v7x
topology: tpu7x:2x2x1
jax: 0.10.0
libtpu: 0.0.40
codegen_flags: <defaults>
</compile_context>

<pallas_src>
import functools

import jax
import jax.numpy as jnp
from jax.experimental import pallas as pl
from jax.experimental.pallas import tpu as pltpu

LANE = 128        # vreg lane width
SUBLANE = 8       # vreg sublane count (f32)
NEG_BIAS = -1e30  # fills padded action columns so exp() underflows to 0


def _round_up(n, m):
    return (n + m - 1) // m * m


def _pad_to(a, shape):
    return jnp.pad(a, [(0, t - s) for s, t in zip(a.shape, shape)])


def actor_kernel(x_ref, w1_ref, b1_ref, w2_ref, b2_ref, w3_ref, b3_ref,
                 out_ref, *, action_dim):
    # One (tb, state_dim)-row tile of x per grid step; weights/biases are
    # VMEM-resident (constant index_map). Three bf16 MXU matmuls with f32
    # accumulation, f32 bias/ReLU/softmax, lane-sliced store of real columns.
    x = x_ref[...].astype(jnp.bfloat16)

    h1 = jnp.dot(x, w1_ref[...], preferred_element_type=jnp.float32) + b1_ref[...]
    h1 = jnp.maximum(h1, 0.0)

    h2 = jnp.dot(h1.astype(jnp.bfloat16), w2_ref[...],
                 preferred_element_type=jnp.float32) + b2_ref[...]
    h2 = jnp.maximum(h2, 0.0)

    logits = jnp.dot(h2.astype(jnp.bfloat16), w3_ref[...],
                     preferred_element_type=jnp.float32) + b3_ref[...]

    # Numerically-stable softmax over the padded action dim. Padded columns
    # carry a -1e30 bias (held in f32), so exp() maps them to exactly 0 and
    # they contribute nothing to the denominator.
    m = jnp.max(logits, axis=-1, keepdims=True)
    e = jnp.exp(logits - m)
    denom = jnp.sum(e, axis=-1, keepdims=True)
    probs = e * pl.reciprocal(denom, approx=True)   # EUP vrcp, effectively free

    # Store only the real action columns (output array is action_dim wide).
    out_ref[...] = probs[:, :action_dim].astype(out_ref.dtype)


def prepare_actor_params(w1, b1, w2, b2, w3, b3):
    """One-time parameter prep: lane-pad hidden/action dims, cast weights to
    bf16 (MXU-native), keep biases in f32, fill padded action bias with -1e30.
    Call once at init; pass the result to actor_forward on every call."""
    state_dim, hidden = w1.shape
    action_dim = w3.shape[1]
    h_pad = _round_up(hidden, LANE)
    a_pad = _round_up(action_dim, LANE)

    f32, bf16 = jnp.float32, jnp.bfloat16
    w1_p = _pad_to(w1.astype(f32), (state_dim, h_pad)).astype(bf16)
    b1_p = _pad_to(b1.reshape(1, -1).astype(f32), (1, h_pad))
    w2_p = _pad_to(w2.astype(f32), (h_pad, h_pad)).astype(bf16)
    b2_p = _pad_to(b2.reshape(1, -1).astype(f32), (1, h_pad))
    w3_p = _pad_to(w3.astype(f32), (h_pad, a_pad)).astype(bf16)
    b3_p = jnp.full((1, a_pad), NEG_BIAS, f32).at[:, :action_dim].set(
        b3.reshape(1, -1).astype(f32))
    return (w1_p, b1_p, w2_p, b2_p, w3_p, b3_p)


@functools.partial(jax.jit, static_argnames=("action_dim", "block_batch"))
def actor_forward(x, params, *, action_dim, block_batch=1024):
    w1_p, b1_p, w2_p, b2_p, w3_p, b3_p = params
    batch, state_dim = x.shape
    h_pad = w1_p.shape[1]
    a_pad = w3_p.shape[1]

    # Batch tile: multiple of 8, capped at block_batch, and capped at
    # ~ceil(batch/2) so there are >= 2 grid steps to shard across v7x's two
    # TensorCores whenever batch > 8 (no-op on v5e/v6e, harmless).
    half = _round_up(max((batch + 1) // 2, 1), SUBLANE)
    tb = min(block_batch, half)
    batch_pad = _round_up(batch, tb)
    grid = (batch_pad // tb,)

    # Row-only padding of x (lane dim stays at state_dim).
    x_p = jnp.pad(x.astype(jnp.float32), ((0, batch_pad - batch), (0, 0)))

    def resident(shape):
        # Constant block index: fetched once, stays in VMEM across grid steps.
        return pl.BlockSpec(shape, lambda i: (0,) * len(shape))

    kernel = functools.partial(actor_kernel, action_dim=action_dim)

    out = pl.pallas_call(
        kernel,
        out_shape=jax.ShapeDtypeStruct((batch_pad, action_dim), jnp.float32),
        grid=grid,
        in_specs=[
            pl.BlockSpec((tb, state_dim), lambda i: (i, 0)),  # x: tiled, unpadded lanes
            resident((state_dim, h_pad)),                     # W1 (bf16)
            resident((1, h_pad)),                             # b1 (f32)
            resident((h_pad, h_pad)),                         # W2 (bf16)
            resident((1, h_pad)),                             # b2 (f32)
            resident((h_pad, a_pad)),                         # W3 (bf16)
            resident((1, a_pad)),                             # b3 (f32, -1e30 pad)
        ],
        out_specs=pl.BlockSpec((tb, action_dim), lambda i: (i, 0)),
        compiler_params=pltpu.CompilerParams(
            dimension_semantics=("parallel",),  # shard batch over v7x's 2 TCs
        ),
    )(x_p, w1_p, b1_p, w2_p, b2_p, w3_p, b3_p)

    return out[:batch]


def init_linear(key, fan_in, fan_out):
    """PyTorch-style nn.Linear init: U(-1/sqrt(fan_in), 1/sqrt(fan_in))."""
    kw, kb = jax.random.split(key)
    bound = 1.0 / jnp.sqrt(float(fan_in))
    # Stored as (in, out) so the kernel computes x @ W (== x @ W_pt.T).
    w = jax.random.uniform(kw, (fan_in, fan_out), jnp.float32, -bound, bound)
    b = jax.random.uniform(kb, (fan_out,), jnp.float32, -bound, bound)
    return w, b


def reference_forward(x, w1, b1, w2, b2, w3, b3):
    h1 = jax.nn.relu(x @ w1 + b1)
    h2 = jax.nn.relu(h1 @ w2 + b2)
    return jax.nn.softmax(h2 @ w3 + b3, axis=-1)


if __name__ == "__main__":
    state_dim = 16
    action_dim = 8
    hidden = 64

    key = jax.random.PRNGKey(0)
    kx, k1, k2, k3 = jax.random.split(key, 4)

    w1, b1 = init_linear(k1, state_dim, hidden)
    w2, b2 = init_linear(k2, hidden, hidden)
    w3, b3 = init_linear(k3, hidden, action_dim)

    params = prepare_actor_params(w1, b1, w2, b2, w3, b3)

    # Case 1: small batch, single grid step.
    x = jax.random.normal(kx, (8, state_dim), jnp.float32)
    out = jax.block_until_ready(actor_forward(x, params, action_dim=action_dim))
    ref = reference_forward(x, w1, b1, w2, b2, w3, b3)
    assert out.shape == (8, action_dim)
    # bf16 matmul operands + approx reciprocal -> ~1e-2 tolerance vs f32 ref.
    assert jnp.allclose(jnp.sum(out, axis=-1), 1.0, atol=1e-2)
    assert jnp.allclose(out, ref, atol=2e-2, rtol=2e-2)

    # Case 2: multiple grid steps (exercise batch tiling / pipelining path).
    x2 = jax.random.normal(kx, (24, state_dim), jnp.float32)
    out2 = jax.block_until_ready(
        actor_forward(x2, params, action_dim=action_dim, block_batch=8))
    ref2 = reference_forward(x2, w1, b1, w2, b2, w3, b3)
    assert out2.shape == (24, action_dim)
    assert jnp.allclose(jnp.sum(out2, axis=-1), 1.0, atol=1e-2)
    assert jnp.allclose(out2, ref2, atol=2e-2, rtol=2e-2)

    print("KERNEL_OK")
</pallas_src>

<mosaic_0001>
module attributes {stable_mosaic.version = 11 : i64} {
  func.func @actor_kernel(%arg0: i32, %arg1: memref<8x16xf32, #tpu.memory_space<vmem>>, %arg2: memref<16x128xbf16, #tpu.memory_space<vmem>>, %arg3: memref<1x128xf32, #tpu.memory_space<vmem>>, %arg4: memref<128x128xbf16, #tpu.memory_space<vmem>>, %arg5: memref<1x128xf32, #tpu.memory_space<vmem>>, %arg6: memref<128x128xbf16, #tpu.memory_space<vmem>>, %arg7: memref<1x128xf32, #tpu.memory_space<vmem>>, %arg8: memref<8x8xf32, #tpu.memory_space<vmem>>) attributes {dimension_semantics = [#tpu.dimension_semantics<parallel>], iteration_bounds = array<i64: 1>, scalar_prefetch = 0 : i64, scratch_operands = 0 : i64, tpu.core_type = #tpu.core_type<tc>, window_params = [{transform_indices = @transform_0, window_bounds = array<i64: 8, 16>}, {pipeline_mode = #tpu.pipeline_mode<synchronous>, transform_indices = @transform_1, window_bounds = array<i64: 16, 128>}, {pipeline_mode = #tpu.pipeline_mode<synchronous>, transform_indices = @transform_2, window_bounds = array<i64: 1, 128>}, {pipeline_mode = #tpu.pipeline_mode<synchronous>, transform_indices = @transform_3, window_bounds = array<i64: 128, 128>}, {pipeline_mode = #tpu.pipeline_mode<synchronous>, transform_indices = @transform_4, window_bounds = array<i64: 1, 128>}, {pipeline_mode = #tpu.pipeline_mode<synchronous>, transform_indices = @transform_5, window_bounds = array<i64: 128, 128>}, {pipeline_mode = #tpu.pipeline_mode<synchronous>, transform_indices = @transform_6, window_bounds = array<i64: 1, 128>}, {transform_indices = @transform_7, window_bounds = array<i64: 8, 8>}]} {
    %c0 = arith.constant 0 : index
    %c0_0 = arith.constant 0 : index
    %0 = vector.load %arg1[%c0, %c0_0] : memref<8x16xf32, #tpu.memory_space<vmem>>, vector<8x16xf32>
    %1 = arith.truncf %0 : vector<8x16xf32> to vector<8x16xbf16>
    %c0_1 = arith.constant 0 : index
    %c0_2 = arith.constant 0 : index
    %2 = vector.load %arg2[%c0_1, %c0_2] : memref<16x128xbf16, #tpu.memory_space<vmem>>, vector<16x128xbf16>
    %cst = arith.constant dense<0.000000e+00> : vector<8x128xf32>
    %3 = tpu.matmul %1, %2, %cst {dimension_numbers = #tpu.dot_dimension_numbers<[1], [0], [0], [1], [0, 0, 1, 1], [], []>} : vector<8x16xbf16>, vector<16x128xbf16>, vector<8x128xf32> -> vector<8x128xf32>
    %c0_3 = arith.constant 0 : index
    %c0_4 = arith.constant 0 : index
    %4 = vector.load %arg3[%c0_3, %c0_4] : memref<1x128xf32, #tpu.memory_space<vmem>>, vector<1x128xf32>
    %5 = vector.broadcast %4 : vector<1x128xf32> to vector<8x128xf32>
    %6 = arith.addf %3, %5 : vector<8x128xf32>
    %cst_5 = arith.constant 0.000000e+00 : f32
    %7 = vector.broadcast %cst_5 : f32 to vector<8x128xf32>
    %8 = arith.maximumf %6, %7 : vector<8x128xf32>
    %9 = arith.truncf %8 : vector<8x128xf32> to vector<8x128xbf16>
    %c0_6 = arith.constant 0 : index
    %c0_7 = arith.constant 0 : index
    %10 = vector.load %arg4[%c0_6, %c0_7] : memref<128x128xbf16, #tpu.memory_space<vmem>>, vector<128x128xbf16>
    %cst_8 = arith.constant dense<0.000000e+00> : vector<8x128xf32>
    %11 = tpu.matmul %9, %10, %cst_8 {dimension_numbers = #tpu.dot_dimension_numbers<[1], [0], [0], [1], [0, 0, 1, 1], [], []>} : vector<8x128xbf16>, vector<128x128xbf16>, vector<8x128xf32> -> vector<8x128xf32>
    %c0_9 = arith.constant 0 : index
    %c0_10 = arith.constant 0 : index
    %12 = vector.load %arg5[%c0_9, %c0_10] : memref<1x128xf32, #tpu.memory_space<vmem>>, vector<1x128xf32>
    %13 = vector.broadcast %12 : vector<1x128xf32> to vector<8x128xf32>
    %14 = arith.addf %11, %13 : vector<8x128xf32>
    %cst_11 = arith.constant 0.000000e+00 : f32
    %15 = vector.broadcast %cst_11 : f32 to vector<8x128xf32>
    %16 = arith.maximumf %14, %15 : vector<8x128xf32>
    %17 = arith.truncf %16 : vector<8x128xf32> to vector<8x128xbf16>
    %c0_12 = arith.constant 0 : index
    %c0_13 = arith.constant 0 : index
    %18 = vector.load %arg6[%c0_12, %c0_13] : memref<128x128xbf16, #tpu.memory_space<vmem>>, vector<128x128xbf16>
    %cst_14 = arith.constant dense<0.000000e+00> : vector<8x128xf32>
    %19 = tpu.matmul %17, %18, %cst_14 {dimension_numbers = #tpu.dot_dimension_numbers<[1], [0], [0], [1], [0, 0, 1, 1], [], []>} : vector<8x128xbf16>, vector<128x128xbf16>, vector<8x128xf32> -> vector<8x128xf32>
    %c0_15 = arith.constant 0 : index
    %c0_16 = arith.constant 0 : index
    %20 = vector.load %arg7[%c0_15, %c0_16] : memref<1x128xf32, #tpu.memory_space<vmem>>, vector<1x128xf32>
    %21 = vector.broadcast %20 : vector<1x128xf32> to vector<8x128xf32>
    %22 = arith.addf %19, %21 : vector<8x128xf32>
    %cst_17 = arith.constant dense<0xFF800000> : vector<8xf32>
    %23 = vector.multi_reduction <maximumf>, %22, %cst_17 [1] : vector<8x128xf32> to vector<8xf32>
    %24 = vector.shape_cast %23 : vector<8xf32> to vector<8x1xf32>
    %25 = vector.broadcast %24 : vector<8x1xf32> to vector<8x128xf32>
    %26 = arith.subf %22, %25 : vector<8x128xf32>
    %27 = math.exp %26 : vector<8x128xf32>
    %cst_18 = arith.constant dense<0.000000e+00> : vector<8xf32>
    %28 = vector.multi_reduction <add>, %27, %cst_18 [1] : vector<8x128xf32> to vector<8xf32>
    %29 = vector.shape_cast %28 : vector<8xf32> to vector<8x1xf32>
    %30 = tpu.reciprocal %29 {approx = true} : vector<8x1xf32> -> vector<8x1xf32>
    %31 = vector.broadcast %30 : vector<8x1xf32> to vector<8x128xf32>
    %32 = arith.mulf %27, %31 : vector<8x128xf32>
    %33 = vector.extract_strided_slice %32 {offsets = [0, 0], sizes = [8, 8], strides = [1, 1]} : vector<8x128xf32> to vector<8x8xf32>
    %c0_19 = arith.constant 0 : index
    %c0_20 = arith.constant 0 : index
    %34 = vector.load %arg8[%c0_19, %c0_20] : memref<8x8xf32, #tpu.memory_space<vmem>>, vector<8x8xf32>
    tpu.vector_store %arg8[%c0_19, %c0_20], %33 {strides = array<i32>} : memref<8x8xf32, #tpu.memory_space<vmem>>, vector<8x8xf32>,
    return
  }
  func.func @transform_0(%arg0: i32) -> (i32, i32) {
    %c0_i32 = arith.constant 0 : i32
    %c0_i32_0 = arith.constant 0 : i32
    return %arg0, %c0_i32 : i32, i32
  }
  func.func @transform_1(%arg0: i32) -> (i32, i32) {
    %c0_i32 = arith.constant 0 : i32
    %c0_i32_0 = arith.constant 0 : i32
    %c0_i32_1 = arith.constant 0 : i32
    return %c0_i32, %c0_i32_0 : i32, i32
  }
  func.func @transform_2(%arg0: i32) -> (i32, i32) {
    %c0_i32 = arith.constant 0 : i32
    %c0_i32_0 = arith.constant 0 : i32
    %c0_i32_1 = arith.constant 0 : i32
    return %c0_i32, %c0_i32_0 : i32, i32
  }
  func.func @transform_3(%arg0: i32) -> (i32, i32) {
    %c0_i32 = arith.constant 0 : i32
    %c0_i32_0 = arith.constant 0 : i32
    %c0_i32_1 = arith.constant 0 : i32
    return %c0_i32, %c0_i32_0 : i32, i32
  }
  func.func @transform_4(%arg0: i32) -> (i32, i32) {
    %c0_i32 = arith.constant 0 : i32
    %c0_i32_0 = arith.constant 0 : i32
    %c0_i32_1 = arith.constant 0 : i32
    return %c0_i32, %c0_i32_0 : i32, i32
  }
  func.func @transform_5(%arg0: i32) -> (i32, i32) {
    %c0_i32 = arith.constant 0 : i32
    %c0_i32_0 = arith.constant 0 : i32
    %c0_i32_1 = arith.constant 0 : i32
    return %c0_i32, %c0_i32_0 : i32, i32
  }
  func.func @transform_6(%arg0: i32) -> (i32, i32) {
    %c0_i32 = arith.constant 0 : i32
    %c0_i32_0 = arith.constant 0 : i32
    %c0_i32_1 = arith.constant 0 : i32
    return %c0_i32, %c0_i32_0 : i32, i32
  }
  func.func @transform_7(%arg0: i32) -> (i32, i32) {
    %c0_i32 = arith.constant 0 : i32
    %c0_i32_0 = arith.constant 0 : i32
    return %arg0, %c0_i32 : i32, i32
  }
}

</mosaic_0001>

<llo_original>
// kernel: actor_forward.1
$region0: #{actor_forward.1}
  #allocation0 [shape = 'u32[]', space=smem, size = 0x4, offset = 0x4, fixed_abs, tag = 'smem constant byte address 0x4 - core index']
  #allocation1 [shape = 'u32[144,128]{1,0:T(1,128)}', space=vmem, size = 0x12000, scoped, tag = 'internal scratch']
  %s0 = inlined_call_operand.hbm [shape: f32[8,16], index: 0, kind: input, shape index: {}]
  %s1 = inlined_call_operand.hbm [shape: bf16[16,128], index: 1, kind: input, shape index: {}]
  %s2 = inlined_call_operand.vmem [shape: f32[1,128], index: 2, kind: input, shape index: {}]
  %s3 = inlined_call_operand.hbm [shape: bf16[128,128], index: 3, kind: input, shape index: {}]
  %s4 = inlined_call_operand.vmem [shape: f32[1,128], index: 4, kind: input, shape index: {}]
  %s5 = inlined_call_operand.hbm [shape: bf16[128,128], index: 5, kind: input, shape index: {}]
  %s6 = inlined_call_operand.vmem [shape: f32[1,128], index: 6, kind: input, shape index: {}]
  %s7 = inlined_call_operand.hbm [shape: f32[8,8], index: 7, kind: output, shape index: {}]
  %s8 = sld [smem:[#allocation0]]
  $region54: #{actor_forward.1} parent=0
    _
  %s10 = ssub.s32 1, %s8
  %s11 = scalar_select 0, %s10, %s8
  $region1: #{actor_forward.1} parent=0
    #allocation2 [shape = 'u8[4096]{0}', space=vmem, size = 0x1000, scoped, tag = 'input window, operand 0, single buffered']
    #allocation3 [shape = 's32[1]{0}', space=sflag, size = 0x4, scoped, tag = 'scoped memory for actor_forward.1']
    #allocation4 [shape = 's32[1]{0}', space=sflag, size = 0x4, scoped, tag = 'scoped memory for actor_forward.1']
    #allocation5 [shape = 'u8[4096]{0}', space=vmem, size = 0x1000, scoped, tag = 'input window, operand 1, single buffered']
    #allocation6 [shape = 's32[1]{0}', space=sflag, size = 0x4, scoped, tag = 'scoped memory for actor_forward.1']
    #allocation7 [shape = 'u8[32768]{0}', space=vmem, size = 0x8000, scoped, tag = 'input window, operand 3, single buffered']
    #allocation8 [shape = 'u8[32768]{0}', space=vmem, size = 0x8000, scoped, tag = 'input window, operand 5, single buffered']
    #allocation9 [shape = 's32[1]{0}', space=sflag, size = 0x4, scoped, tag = 'scoped memory for actor_forward.1']
    #allocation10 [shape = 'u8[4096]{0}', space=vmem, size = 0x1000, scoped, tag = 'output window, operand 0, single buffered']
    %12 = vsyncpa [#allocation3], 0
    %13 = vsyncpa [#allocation6], 0
    %14 = vsyncpa [#allocation9], 0
    %15 = vsyncpa [#allocation4], 0
    // Predicated region
    $region2: #{actor_forward.1} parent=1 // pred_check
      _
    $region3: #{actor_forward.1} parent=1 // pred_check_branch
      %17 = sbr.rel (0) target = $region5
    $region4: #{actor_forward.1} parent=1 // pred_region
      %s19 = ssub.s32 128, 128
      %20 = vsyncadd [#allocation3], %s19
      %s22 = sshll.u32 [#allocation2], 4
      %s23 = int_to_ptr.vmem [resolvable:$true] %s22
      %25 = dma.hbm_to_vmem [thread:$0]  %s0, 128, %s23, [#allocation3]
    $region5: #{actor_forward.1} parent=1 // pred_fallthru
      _
    // Predicated region
    $region6: #{actor_forward.1} parent=1 // pred_check
      _
    $region7: #{actor_forward.1} parent=1 // pred_check_branch
      %27 = sbr.rel (0) target = $region9
    $region8: #{actor_forward.1} parent=1 // pred_region
      %s29 = ssub.s32 128, 128
      %30 = vsyncadd [#allocation6], %s29
      %s31 = sshll.u32 [#allocation5], 4
      %s32 = int_to_ptr.vmem [resolvable:$true] %s31
      %37 = dma.hbm_to_vmem [thread:$0]  %s1, 128, %s32, [#allocation6], 64, 64, 4
    $region9: #{actor_forward.1} parent=1 // pred_fallthru
      _
    // Predicated region
    $region10: #{actor_forward.1} parent=1 // pred_check
      _
    $region11: #{actor_forward.1} parent=1 // pred_check_branch
      %39 = sbr.rel (0) target = $region13
    $region12: #{actor_forward.1} parent=1 // pred_region
      _
    $region13: #{actor_forward.1} parent=1 // pred_fallthru
      _
    // Predicated region
    $region14: #{actor_forward.1} parent=1 // pred_check
      _
    $region15: #{actor_forward.1} parent=1 // pred_check_branch
      %41 = sbr.rel (0) target = $region17
    $region16: #{actor_forward.1} parent=1 // pred_region
      %s43 = ssub.s32 1024, 1024
      %44 = vsyncadd [#allocation6], %s43
      %s45 = sshll.u32 [#allocation7], 4
      %s46 = int_to_ptr.vmem [resolvable:$true] %s45
      %51 = dma.hbm_to_vmem [thread:$0]  %s3, 1024, %s46, [#allocation6], 64, 64, 4
    $region17: #{actor_forward.1} parent=1 // pred_fallthru
      _
    // Predicated region
    $region18: #{actor_forward.1} parent=1 // pred_check
      _
    $region19: #{actor_forward.1} parent=1 // pred_check_branch
      %53 = sbr.rel (0) target = $region21
    $region20: #{actor_forward.1} parent=1 // pred_region
      _
    $region21: #{actor_forward.1} parent=1 // pred_fallthru
      _
    // Predicated region
    $region22: #{actor_forward.1} parent=1 // pred_check
      _
    $region23: #{actor_forward.1} parent=1 // pred_check_branch
      %55 = sbr.rel (0) target = $region25
    $region24: #{actor_forward.1} parent=1 // pred_region
      %s57 = ssub.s32 1024, 1024
      %58 = vsyncadd [#allocation9], %s57
      %s59 = sshll.u32 [#allocation8], 4
      %s60 = int_to_ptr.vmem [resolvable:$true] %s59
      %65 = dma.hbm_to_vmem [thread:$0]  %s5, 1024, %s60, [#allocation9], 64, 64, 4
    $region25: #{actor_forward.1} parent=1 // pred_fallthru
      _
    // Predicated region
    $region26: #{actor_forward.1} parent=1 // pred_check
      _
    $region27: #{actor_forward.1} parent=1 // pred_check_branch
      %67 = sbr.rel (0) target = $region29
    $region28: #{actor_forward.1} parent=1 // pred_region
      _
    $region29: #{actor_forward.1} parent=1 // pred_fallthru
      _
    // Predicated region
    $region30: #{actor_forward.1} parent=1 // pred_check
      _
    $region31: #{actor_forward.1} parent=1 // pred_check_branch
      %69 = sbr.rel (0) target = $region33
    $region32: #{actor_forward.1} parent=1 // pred_region
      %70 = dma.done [#allocation3], 128
    $region33: #{actor_forward.1} parent=1 // pred_fallthru
      _
    // Predicated region
    $region34: #{actor_forward.1} parent=1 // pred_check
      _
    $region35: #{actor_forward.1} parent=1 // pred_check_branch
      %72 = sbr.rel (0) target = $region37
    $region36: #{actor_forward.1} parent=1 // pred_region
      %73 = dma.done [#allocation6], 128
    $region37: #{actor_forward.1} parent=1 // pred_fallthru
      _
    // Predicated region
    $region38: #{actor_forward.1} parent=1 // pred_check
      _
    $region39: #{actor_forward.1} parent=1 // pred_check_branch
      %75 = sbr.rel (0) target = $region41
    $region40: #{actor_forward.1} parent=1 // pred_region
      %76 = dma.done [#allocation6], 1024
    $region41: #{actor_forward.1} parent=1 // pred_fallthru
      _
    // Predicated region
    $region42: #{actor_forward.1} parent=1 // pred_check
      _
    $region43: #{actor_forward.1} parent=1 // pred_check_branch
      %78 = sbr.rel (0) target = $region45
    $region44: #{actor_forward.1} parent=1 // pred_region
      %79 = dma.done [#allocation9], 1024
    $region45: #{actor_forward.1} parent=1 // pred_fallthru
      _
    %v81 = vld [vmem:[#allocation2] sm:$0xff]
    %v82 = vpack.c.bf16 %v81, %v81
    %v83 = vld [vmem:[#allocation5] sm:$0xf]
    %v84 = vld [vmem:[#allocation5 + $0x4] sm:$0xf]
    %v85 = vld [vmem:[%s2] sm:$0x1]
    %v87 = vlaneseq
    %v88 = vshrl.u32 %v87, 7
    %v89 = vsub.s32 0, %v88
    %v90 = vrot.slane %v85, %v89
    %v94 = vunpack.c.l.b16 %v83
    %v95 = vunpack.c.l.b16 %v84
    %v96 = vpack.c.b16 %v95, %v94
    %vm98 = vcmask 130048
    %v100 = vsel %vm98, %v82, 0
    %102 = vmatprep.subr.bf16.mxu0 0
    %103 = vmatpush1.bf16.msra.mxu0 %v96
    %104 = vmatprep.subr.bf16.mxu0 0
    %105 = vmatpush1.bf16.msra.mxu0 0
    %106 = vmatprep.subr.bf16.mxu0 0
    %107 = vmatpush1.bf16.msra.mxu0 0
    %108 = vmatprep.subr.bf16.mxu0 0
    %109 = vmatpush1.bf16.msra.mxu0 0
    %110 = vmatprep.subr.bf16.mxu0 0
    %111 = vmatpush1.bf16.msra.mxu0 0
    %112 = vmatprep.subr.bf16.mxu0 0
    %113 = vmatpush1.bf16.msra.mxu0 0
    %114 = vmatprep.subr.bf16.mxu0 0
    %115 = vmatpush1.bf16.msra.mxu0 0
    %116 = vmatprep.subr.bf16.mxu0 0
    %117 = vmatpush1.bf16.msra.mxu0 0
    %118 = vmatprep.subr.bf16.mxu0 0
    %119 = vmatpush1.bf16.msra.mxu0 0
    %120 = vmatprep.subr.bf16.mxu0 0
    %121 = vmatpush1.bf16.msra.mxu0 0
    %122 = vmatprep.subr.bf16.mxu0 0
    %123 = vmatpush1.bf16.msra.mxu0 0
    %124 = vmatprep.subr.bf16.mxu0 0
    %125 = vmatpush1.bf16.msra.mxu0 0
    %126 = vmatprep.subr.bf16.mxu0 0
    %127 = vmatpush1.bf16.msra.mxu0 0
    %128 = vmatprep.subr.bf16.mxu0 0
    %129 = vmatpush1.bf16.msra.mxu0 0
    %130 = vmatprep.subr.bf16.mxu0 0
    %131 = vmatpush1.bf16.msra.mxu0 0
    %132 = vmatprep.subr.bf16.mxu0 0
    %133 = vmatpush1.bf16.msra.mxu0 0
    %134 = vmatprep.mubr.bf16.mxu0 0
    %135 = vmatmul.mubr.bf16.gmra.mrb[0].mxu0 %v100
    %v136 = vpop.f32.mrb[0].mxu0
    %v137 = vadd.f32 %v90, %v136
    %v138 = vpop.f32.mrb[0].mxu0
    %v139 = vpop.f32.mrb[0].mxu0
    %v140 = vpop.f32.mrb[0].mxu0
    %141 = vdwg.mxu0
    %v142 = vmax.f32 %v137, 0.0
    %v143 = vpack.c.bf16 %v142, %v142
    %v144 = vld [vmem:[#allocation7] sm:$0xf]
    %v145 = vld [vmem:[#allocation7 + $0x4] sm:$0xf]
    %v146 = vld [vmem:[#allocation7 + $0x8] sm:$0xf]
    %v147 = vld [vmem:[#allocation7 + $0xc] sm:$0xf]
    %v148 = vld [vmem:[#allocation7 + $0x10] sm:$0xf]
    %v149 = vld [vmem:[#allocation7 + $0x14] sm:$0xf]
    %v150 = vld [vmem:[#allocation7 + $0x18] sm:$0xf]
    %v151 = vld [vmem:[#allocation7 + $0x1c] sm:$0xf]
    %v152 = vld [vmem:[#allocation7 + $0x20] sm:$0xf]
    %v153 = vld [vmem:[#allocation7 + $0x24] sm:$0xf]
    %v154 = vld [vmem:[#allocation7 + $0x28] sm:$0xf]
    %v155 = vld [vmem:[#allocation7 + $0x2c] sm:$0xf]
    %v156 = vld [vmem:[#allocation7 + $0x30] sm:$0xf]
    %v157 = vld [vmem:[#allocation7 + $0x34] sm:$0xf]
    %v158 = vld [vmem:[#allocation7 + $0x38] sm:$0xf]
    %v159 = vld [vmem:[#allocation7 + $0x3c] sm:$0xf]
    %v160 = vld [vmem:[%s4] sm:$0x1]
    %v162 = vlaneseq
    %v163 = vshrl.u32 %v162, 7
    %v164 = vsub.s32 0, %v163
    %v165 = vrot.slane %v160, %v164
    %v183 = vunpack.c.l.b16 %v144
    %v184 = vunpack.c.l.b16 %v145
    %v185 = vunpack.c.l.b16 %v146
    %v186 = vunpack.c.l.b16 %v147
    %v187 = vunpack.c.l.b16 %v148
    %v188 = vunpack.c.l.b16 %v149
    %v189 = vunpack.c.l.b16 %v150
    %v190 = vunpack.c.l.b16 %v151
    %v191 = vunpack.c.l.b16 %v152
    %v192 = vunpack.c.l.b16 %v153
    %v193 = vunpack.c.l.b16 %v154
    %v194 = vunpack.c.l.b16 %v155
    %v195 = vunpack.c.l.b16 %v156
    %v196 = vunpack.c.l.b16 %v157
    %v197 = vunpack.c.l.b16 %v158
    %v198 = vunpack.c.l.b16 %v159
    %v199 = vpack.c.b16 %v184, %v183
    %v200 = vpack.c.b16 %v186, %v185
    %v201 = vpack.c.b16 %v188, %v187
    %v202 = vpack.c.b16 %v190, %v189
    %v203 = vpack.c.b16 %v192, %v191
    %v204 = vpack.c.b16 %v194, %v193
    %v205 = vpack.c.b16 %v196, %v195
    %v206 = vpack.c.b16 %v198, %v197
    %215 = vmatprep.subr.bf16.mxu0 0
    %216 = vmatpush1.bf16.msra.mxu0 %v199
    %217 = vmatprep.subr.bf16.mxu0 0
    %218 = vmatpush1.bf16.msra.mxu0 %v200
    %219 = vmatprep.subr.bf16.mxu0 0
    %220 = vmatpush1.bf16.msra.mxu0 %v201
    %221 = vmatprep.subr.bf16.mxu0 0
    %222 = vmatpush1.bf16.msra.mxu0 %v202
    %223 = vmatprep.subr.bf16.mxu0 0
    %224 = vmatpush1.bf16.msra.mxu0 %v203
    %225 = vmatprep.subr.bf16.mxu0 0
    %226 = vmatpush1.bf16.msra.mxu0 %v204
    %227 = vmatprep.subr.bf16.mxu0 0
    %228 = vmatpush1.bf16.msra.mxu0 %v205
    %229 = vmatprep.subr.bf16.mxu0 0
    %230 = vmatpush1.bf16.msra.mxu0 %v206
    %231 = vmatprep.subr.bf16.mxu0 0
    %232 = vmatpush1.bf16.msra.mxu0 0
    %233 = vmatprep.subr.bf16.mxu0 0
    %234 = vmatpush1.bf16.msra.mxu0 0
    %235 = vmatprep.subr.bf16.mxu0 0
    %236 = vmatpush1.bf16.msra.mxu0 0
    %237 = vmatprep.subr.bf16.mxu0 0
    %238 = vmatpush1.bf16.msra.mxu0 0
    %239 = vmatprep.subr.bf16.mxu0 0
    %240 = vmatpush1.bf16.msra.mxu0 0
    %241 = vmatprep.subr.bf16.mxu0 0
    %242 = vmatpush1.bf16.msra.mxu0 0
    %243 = vmatprep.subr.bf16.mxu0 0
    %244 = vmatpush1.bf16.msra.mxu0 0
    %245 = vmatprep.subr.bf16.mxu0 0
    %246 = vmatpush1.bf16.msra.mxu0 0
    %247 = vmatprep.mubr.bf16.mxu0 0
    %248 = vmatmul.mubr.bf16.gmra.mrb[0].mxu0 %v143
    %v249 = vpop.f32.mrb[0].mxu0
    %v250 = vadd.f32 %v165, %v249
    %v251 = vpop.f32.mrb[0].mxu0
    %v252 = vpop.f32.mrb[0].mxu0
    %v253 = vpop.f32.mrb[0].mxu0
    %254 = vdwg.mxu0
    %v255 = vmax.f32 %v250, 0.0
    %v256 = vpack.c.bf16 %v255, %v255
    %v257 = vld [vmem:[#allocation8] sm:$0xf]
    %v258 = vld [vmem:[#allocation8 + $0x4] sm:$0xf]
    %v259 = vld [vmem:[#allocation8 + $0x8] sm:$0xf]
    %v260 = vld [vmem:[#allocation8 + $0xc] sm:$0xf]
    %v261 = vld [vmem:[#allocation8 + $0x10] sm:$0xf]
    %v262 = vld [vmem:[#allocation8 + $0x14] sm:$0xf]
    %v263 = vld [vmem:[#allocation8 + $0x18] sm:$0xf]
    %v264 = vld [vmem:[#allocation8 + $0x1c] sm:$0xf]
    %v265 = vld [vmem:[#allocation8 + $0x20] sm:$0xf]
    %v266 = vld [vmem:[#allocation8 + $0x24] sm:$0xf]
    %v267 = vld [vmem:[#allocation8 + $0x28] sm:$0xf]
    %v268 = vld [vmem:[#allocation8 + $0x2c] sm:$0xf]
    %v269 = vld [vmem:[#allocation8 + $0x30] sm:$0xf]
    %v270 = vld [vmem:[#allocation8 + $0x34] sm:$0xf]
    %v271 = vld [vmem:[#allocation8 + $0x38] sm:$0xf]
    %v272 = vld [vmem:[#allocation8 + $0x3c] sm:$0xf]
    %v273 = vld [vmem:[%s6] sm:$0x1]
    %v275 = vlaneseq
    %v276 = vshrl.u32 %v275, 7
    %v277 = vsub.s32 0, %v276
    %v278 = vrot.slane %v273, %v277
    %v296 = vunpack.c.l.b16 %v257
    %v297 = vunpack.c.l.b16 %v258
    %v298 = vunpack.c.l.b16 %v259
    %v299 = vunpack.c.l.b16 %v260
    %v300 = vunpack.c.l.b16 %v261
    %v301 = vunpack.c.l.b16 %v262
    %v302 = vunpack.c.l.b16 %v263
    %v303 = vunpack.c.l.b16 %v264
    %v304 = vunpack.c.l.b16 %v265
    %v305 = vunpack.c.l.b16 %v266
    %v306 = vunpack.c.l.b16 %v267
    %v307 = vunpack.c.l.b16 %v268
    %v308 = vunpack.c.l.b16 %v269
    %v309 = vunpack.c.l.b16 %v270
    %v310 = vunpack.c.l.b16 %v271
    %v311 = vunpack.c.l.b16 %v272
    %v312 = vpack.c.b16 %v297, %v296
    %v313 = vpack.c.b16 %v299, %v298
    %v314 = vpack.c.b16 %v301, %v300
    %v315 = vpack.c.b16 %v303, %v302
    %v316 = vpack.c.b16 %v305, %v304
    %v317 = vpack.c.b16 %v307, %v306
    %v318 = vpack.c.b16 %v309, %v308
    %v319 = vpack.c.b16 %v311, %v310
    %328 = vmatprep.subr.bf16.mxu0 0
    %329 = vmatpush1.bf16.msra.mxu0 %v312
    %330 = vmatprep.subr.bf16.mxu0 0
    %331 = vmatpush1.bf16.msra.mxu0 %v313
    %332 = vmatprep.subr.bf16.mxu0 0
    %333 = vmatpush1.bf16.msra.mxu0 %v314
    %334 = vmatprep.subr.bf16.mxu0 0
    %335 = vmatpush1.bf16.msra.mxu0 %v315
    %336 = vmatprep.subr.bf16.mxu0 0
    %337 = vmatpush1.bf16.msra.mxu0 %v316
    %338 = vmatprep.subr.bf16.mxu0 0
    %339 = vmatpush1.bf16.msra.mxu0 %v317
    %340 = vmatprep.subr.bf16.mxu0 0
    %341 = vmatpush1.bf16.msra.mxu0 %v318
    %342 = vmatprep.subr.bf16.mxu0 0
    %343 = vmatpush1.bf16.msra.mxu0 %v319
    %344 = vmatprep.subr.bf16.mxu0 0
    %345 = vmatpush1.bf16.msra.mxu0 0
    %346 = vmatprep.subr.bf16.mxu0 0
    %347 = vmatpush1.bf16.msra.mxu0 0
    %348 = vmatprep.subr.bf16.mxu0 0
    %349 = vmatpush1.bf16.msra.mxu0 0
    %350 = vmatprep.subr.bf16.mxu0 0
    %351 = vmatpush1.bf16.msra.mxu0 0
    %352 = vmatprep.subr.bf16.mxu0 0
    %353 = vmatpush1.bf16.msra.mxu0 0
    %354 = vmatprep.subr.bf16.mxu0 0
    %355 = vmatpush1.bf16.msra.mxu0 0
    %356 = vmatprep.subr.bf16.mxu0 0
    %357 = vmatpush1.bf16.msra.mxu0 0
    %358 = vmatprep.subr.bf16.mxu0 0
    %359 = vmatpush1.bf16.msra.mxu0 0
    %360 = vmatprep.mubr.bf16.mxu0 0
    %361 = vmatmul.mubr.bf16.gmra.mrb[0].mxu0 %v256
    %v362 = vpop.f32.mrb[0].mxu0
    %v363 = vadd.f32 %v278, %v362
    %v364 = vpop.f32.mrb[0].mxu0
    %v365 = vpop.f32.mrb[0].mxu0
    %v366 = vpop.f32.mrb[0].mxu0
    %367 = vdwg.mxu0
    %368 = vmax.xlane.f32.xlu0 %v363
    %v369 = vpop.xlane.xlu0 %368
    %v370 = vsub.f32 %v363, %v369
    %v371 = vmul.f32 %v370, 1.442695
    %v372 = vpow.pop %v371
    %373 = vadd.xlane.f32.xlu0 %v372
    %v374 = vpop.xlane.xlu0 %373
    %v375 = vrcp.pop %v374
    %v376 = vmul.f32 %v372, %v375
    %vm377 = vcmask 64512
    %378 = vst.msk [vmem:[#allocation10] sm:$0xff] %vm377, %v376
    // Predicated region
    $region46: #{actor_forward.1} parent=1 // pred_check
      _
    $region47: #{actor_forward.1} parent=1 // pred_check_branch
      %380 = sbr.rel (0) target = $region49
    $region48: #{actor_forward.1} parent=1 // pred_region
      %s382 = ssub.s32 128, 128
      %383 = vsyncadd [#allocation4], %s382
      %s385 = sshll.u32 [#allocation10], 4
      %s386 = int_to_ptr.vmem [resolvable:$true] %s385
      %388 = dma.vmem_to_hbm [thread:$0]  %s386, 128, %s7, [#allocation4]
    $region49: #{actor_forward.1} parent=1 // pred_fallthru
      _
    // Predicated region
    $region50: #{actor_forward.1} parent=1 // pred_check
      _
    $region51: #{actor_forward.1} parent=1 // pred_check_branch
      %390 = sbr.rel (0) target = $region53
    $region52: #{actor_forward.1} parent=1 // pred_region
      %391 = dma.done [#allocation4], 128
    $region53: #{actor_forward.1} parent=1 // pred_fallthru
      _
    %392 = vsyncpa [#allocation3], 1
    %393 = vsyncpa [#allocation6], 1
    %394 = vsyncpa [#allocation9], 1
    %395 = vsyncpa [#allocation4], 1

</llo_original>
